<compile_context>
chip_gen: v5e
topology: v5e:2x2
jax: 0.10.0
libtpu: 0.0.40
codegen_flags: <defaults>
</compile_context>

<pallas_src>
import functools

import jax
import jax.numpy as jnp
from jax.experimental import pallas as pl
from jax.experimental.pallas import tpu as pltpu


def _mlp_kernel(x_ref, w1_ref, b1_ref, w2_ref, b2_ref, w3_ref, b3_ref, o_ref,
                *, compute_dtype):
    cdt = compute_dtype
    # In-kernel cast of the activations (f32 in HBM/VMEM -> MXU operand dtype);
    # the VPU has idle VALU slots to absorb this.
    x = x_ref[...].astype(cdt)

    # Layer 1: Linear + ReLU.  MXU accumulates in f32; elementwise stays f32.
    h = jnp.dot(x, w1_ref[...], preferred_element_type=jnp.float32)
    h = jnp.maximum(h + b1_ref[...], 0.0)

    # Layer 2: Linear + ReLU.
    h = jnp.dot(h.astype(cdt), w2_ref[...], preferred_element_type=jnp.float32)
    h = jnp.maximum(h + b2_ref[...], 0.0)

    # Layer 3: Linear + ReLU (the PyTorch module has a final ReLU).
    o = jnp.dot(h.astype(cdt), w3_ref[...], preferred_element_type=jnp.float32)
    o = jnp.maximum(o + b3_ref[...], 0.0)

    o_ref[...] = o.astype(o_ref.dtype)


def _default_pack_g():
    """g=8 fills the 256x256 MXU on v6e/v7x; v5e's 128x128 MXU gets g=4."""
    try:
        kind = jax.devices()[0].device_kind.lower()
    except Exception:
        return 8
    if "v5 lite" in kind or "v5e" in kind or "v5lite" in kind:
        return 4
    return 8


def _block_diag(w, g):
    """[fi, fo] -> [g*fi, g*fo] block-diagonal replication of w."""
    fi, fo = w.shape
    eye = jnp.eye(g, dtype=w.dtype)
    bd = eye[:, None, :, None] * w[None, :, None, :]      # [g, fi, g, fo]
    return bd.reshape(g * fi, g * fo)


def relational_model_forward(x, params, *, pack_g=None, row_tile=2048,
                             compute_dtype=jnp.bfloat16, out_dtype=None):
    """x: [batch_size, n_relations, input_size] -> [batch_size, n_relations, output_size]."""
    w1, b1, w2, b2, w3, b3 = params
    batch_size, n_relations, input_size = x.shape
    hidden_size = w1.shape[1]
    output_size = w3.shape[1]
    if out_dtype is None:
        out_dtype = x.dtype          # pass jnp.bfloat16 to halve output HBM write traffic
    if compute_dtype is None:
        compute_dtype = x.dtype
    g = _default_pack_g() if pack_g is None else pack_g

    n_rows = batch_size * n_relations
    n_groups = pl.cdiv(n_rows, g)    # packed row-groups (g rows per group)

    # Row-group tile: second-to-last block dim must be a multiple of 8 or the full extent.
    pack = 8
    row_tile = max(pack, (min(int(row_tile), 8192) // pack) * pack)
    if n_groups < 2 * pack:
        # Tiny input: a single grid step whose block equals the full array
        # (no (8,128) divisibility requirement, no pipelining machinery).
        row_tile = n_groups
        n_groups_pad = n_groups
    else:
        # Force >= 2 grid steps so the 'parallel' row axis can shard across both v7x
        # TensorCores, while keeping tiles large to amortize per-step overhead.
        row_tile = min(row_tile, max(pack, (pl.cdiv(n_groups, 2) // pack) * pack))
        n_groups_pad = pl.cdiv(n_groups, row_tile) * row_tile
    grid = (max(1, n_groups_pad // row_tile),)

    # Pack g rows per lane-group: [N, F] -> [N/g, g*F] (free, row-major contiguous).
    x_flat = x.reshape(n_rows, input_size)
    n_rows_pad = n_groups_pad * g
    if n_rows_pad != n_rows:
        x_flat = jnp.pad(x_flat, ((0, n_rows_pad - n_rows), (0, 0)))
    x_grp = x_flat.reshape(n_groups_pad, g * input_size)

    # Block-diagonal weights (tiny, grid-invariant) in the MXU operand dtype; biases f32.
    w1_bd = _block_diag(w1, g).astype(compute_dtype)
    w2_bd = _block_diag(w2, g).astype(compute_dtype)
    w3_bd = _block_diag(w3, g).astype(compute_dtype)
    b1_t = jnp.tile(b1.astype(jnp.float32).reshape(1, hidden_size), (1, g))
    b2_t = jnp.tile(b2.astype(jnp.float32).reshape(1, hidden_size), (1, g))
    b3_t = jnp.tile(b3.astype(jnp.float32).reshape(1, output_size), (1, g))

    gF, gH, gO = g * input_size, g * hidden_size, g * output_size

    out_grp = pl.pallas_call(
        functools.partial(_mlp_kernel, compute_dtype=compute_dtype),
        out_shape=jax.ShapeDtypeStruct((n_groups_pad, gO), out_dtype),
        grid_spec=pltpu.PrefetchScalarGridSpec(
            num_scalar_prefetch=0,
            grid=grid,
            in_specs=[
                # activations: tiled over packed row-groups
                pl.BlockSpec((row_tile, gF), lambda i: (i, 0)),
                # block-diagonal weights / tiled biases: full blocks, resident across grid
                pl.BlockSpec((gF, gH), lambda i: (0, 0)),
                pl.BlockSpec((1, gH), lambda i: (0, 0)),
                pl.BlockSpec((gH, gH), lambda i: (0, 0)),
                pl.BlockSpec((1, gH), lambda i: (0, 0)),
                pl.BlockSpec((gH, gO), lambda i: (0, 0)),
                pl.BlockSpec((1, gO), lambda i: (0, 0)),
            ],
            out_specs=pl.BlockSpec((row_tile, gO), lambda i: (i, 0)),
        ),
        compiler_params=pltpu.CompilerParams(
            # parallel row axis -> shards across the 2 TensorCores on v7x when grid >= 2
            dimension_semantics=("parallel",),
        ),
    )(x_grp, w1_bd, b1_t, w2_bd, b2_t, w3_bd, b3_t)

    # Unpack lane groups, drop padded rows (they hold ReLU(bias) garbage), restore shape.
    out_flat = out_grp.reshape(n_rows_pad, output_size)[:n_rows]
    return out_flat.reshape(batch_size, n_relations, output_size)


def init_params(key, input_size, hidden_size, output_size, dtype=jnp.float32):
    """Deterministic init mimicking nn.Linear's U(-1/sqrt(fan_in), 1/sqrt(fan_in))."""
    ks = jax.random.split(key, 6)

    def linear(kw, kb, fan_in, fan_out):
        bound = 1.0 / jnp.sqrt(jnp.array(fan_in, dtype))
        w = jax.random.uniform(kw, (fan_in, fan_out), dtype, -bound, bound)
        b = jax.random.uniform(kb, (1, fan_out), dtype, -bound, bound)
        return w, b

    w1, b1 = linear(ks[0], ks[1], input_size, hidden_size)
    w2, b2 = linear(ks[2], ks[3], hidden_size, hidden_size)
    w3, b3 = linear(ks[4], ks[5], hidden_size, output_size)
    return (w1, b1, w2, b2, w3, b3)


if __name__ == "__main__":
    key = jax.random.PRNGKey(0)
    k_x, k_p = jax.random.split(key)

    batch_size, n_relations = 2, 8
    input_size, hidden_size, output_size = 32, 32, 16

    x = jax.random.normal(k_x, (batch_size, n_relations, input_size), jnp.float32)
    params = init_params(k_p, input_size, hidden_size, output_size)

    # f32-operand compute path: tolerance check against the pure-JAX reference
    # (MXU f32 is internally multi-pass, so close-but-not-bit-exact is expected).
    out_f32 = jax.block_until_ready(
        relational_model_forward(x, params, compute_dtype=jnp.float32))
    # Default bf16-operand path: MXU-native operands, f32 accumulation.
    out_bf16 = jax.block_until_ready(relational_model_forward(x, params))

    # Pure-JAX reference of the same forward pass (accurate f32 matmuls).
    w1, b1, w2, b2, w3, b3 = params
    with jax.default_matmul_precision("highest"):
        xf = x.reshape(-1, input_size)
        ref = jnp.maximum(xf @ w1 + b1, 0.0)
        ref = jnp.maximum(ref @ w2 + b2, 0.0)
        ref = jnp.maximum(ref @ w3 + b3, 0.0)
    ref = ref.reshape(batch_size, n_relations, output_size)

    assert out_f32.shape == (batch_size, n_relations, output_size)
    assert out_bf16.shape == (batch_size, n_relations, output_size)
    assert jnp.allclose(out_f32, ref, atol=1e-4, rtol=1e-4)
    assert jnp.allclose(out_bf16, ref, atol=5e-2, rtol=5e-2)
    print("KERNEL_OK")
</pallas_src>

<mosaic_0001>
module attributes {stable_mosaic.version = 11 : i64} {
  func.func @_mlp_kernel(%arg0: i32, %arg1: memref<2x256xf32, #tpu.memory_space<vmem>>, %arg2: memref<256x256xf32, #tpu.memory_space<vmem>>, %arg3: memref<1x256xf32, #tpu.memory_space<vmem>>, %arg4: memref<256x256xf32, #tpu.memory_space<vmem>>, %arg5: memref<1x256xf32, #tpu.memory_space<vmem>>, %arg6: memref<256x128xf32, #tpu.memory_space<vmem>>, %arg7: memref<1x128xf32, #tpu.memory_space<vmem>>, %arg8: memref<2x128xf32, #tpu.memory_space<vmem>>) attributes {dimension_semantics = [#tpu.dimension_semantics<parallel>], iteration_bounds = array<i64: 1>, scalar_prefetch = 0 : i64, scratch_operands = 0 : i64, tpu.core_type = #tpu.core_type<tc>, window_params = [{transform_indices = @transform_0, window_bounds = array<i64: 2, 256>}, {pipeline_mode = #tpu.pipeline_mode<synchronous>, transform_indices = @transform_1, window_bounds = array<i64: 256, 256>}, {pipeline_mode = #tpu.pipeline_mode<synchronous>, transform_indices = @transform_2, window_bounds = array<i64: 1, 256>}, {pipeline_mode = #tpu.pipeline_mode<synchronous>, transform_indices = @transform_3, window_bounds = array<i64: 256, 256>}, {pipeline_mode = #tpu.pipeline_mode<synchronous>, transform_indices = @transform_4, window_bounds = array<i64: 1, 256>}, {pipeline_mode = #tpu.pipeline_mode<synchronous>, transform_indices = @transform_5, window_bounds = array<i64: 256, 128>}, {pipeline_mode = #tpu.pipeline_mode<synchronous>, transform_indices = @transform_6, window_bounds = array<i64: 1, 128>}, {transform_indices = @transform_7, window_bounds = array<i64: 2, 128>}]} {
    %c0 = arith.constant 0 : index
    %c0_0 = arith.constant 0 : index
    %0 = vector.load %arg1[%c0, %c0_0] : memref<2x256xf32, #tpu.memory_space<vmem>>, vector<2x256xf32>
    %c0_1 = arith.constant 0 : index
    %c0_2 = arith.constant 0 : index
    %1 = vector.load %arg2[%c0_1, %c0_2] : memref<256x256xf32, #tpu.memory_space<vmem>>, vector<256x256xf32>
    %cst = arith.constant dense<0.000000e+00> : vector<2x256xf32>
    %2 = tpu.matmul %0, %1, %cst {dimension_numbers = #tpu.dot_dimension_numbers<[1], [0], [0], [1], [0, 0, 1, 1], [], []>} : vector<2x256xf32>, vector<256x256xf32>, vector<2x256xf32> -> vector<2x256xf32>
    %c0_3 = arith.constant 0 : index
    %c0_4 = arith.constant 0 : index
    %3 = vector.load %arg3[%c0_3, %c0_4] : memref<1x256xf32, #tpu.memory_space<vmem>>, vector<1x256xf32>
    %4 = vector.broadcast %3 : vector<1x256xf32> to vector<2x256xf32>
    %5 = arith.addf %2, %4 : vector<2x256xf32>
    %cst_5 = arith.constant 0.000000e+00 : f32
    %6 = vector.broadcast %cst_5 : f32 to vector<2x256xf32>
    %7 = arith.maximumf %5, %6 : vector<2x256xf32>
    %c0_6 = arith.constant 0 : index
    %c0_7 = arith.constant 0 : index
    %8 = vector.load %arg4[%c0_6, %c0_7] : memref<256x256xf32, #tpu.memory_space<vmem>>, vector<256x256xf32>
    %cst_8 = arith.constant dense<0.000000e+00> : vector<2x256xf32>
    %9 = tpu.matmul %7, %8, %cst_8 {dimension_numbers = #tpu.dot_dimension_numbers<[1], [0], [0], [1], [0, 0, 1, 1], [], []>} : vector<2x256xf32>, vector<256x256xf32>, vector<2x256xf32> -> vector<2x256xf32>
    %c0_9 = arith.constant 0 : index
    %c0_10 = arith.constant 0 : index
    %10 = vector.load %arg5[%c0_9, %c0_10] : memref<1x256xf32, #tpu.memory_space<vmem>>, vector<1x256xf32>
    %11 = vector.broadcast %10 : vector<1x256xf32> to vector<2x256xf32>
    %12 = arith.addf %9, %11 : vector<2x256xf32>
    %cst_11 = arith.constant 0.000000e+00 : f32
    %13 = vector.broadcast %cst_11 : f32 to vector<2x256xf32>
    %14 = arith.maximumf %12, %13 : vector<2x256xf32>
    %c0_12 = arith.constant 0 : index
    %c0_13 = arith.constant 0 : index
    %15 = vector.load %arg6[%c0_12, %c0_13] : memref<256x128xf32, #tpu.memory_space<vmem>>, vector<256x128xf32>
    %cst_14 = arith.constant dense<0.000000e+00> : vector<2x128xf32>
    %16 = tpu.matmul %14, %15, %cst_14 {dimension_numbers = #tpu.dot_dimension_numbers<[1], [0], [0], [1], [0, 0, 1, 1], [], []>} : vector<2x256xf32>, vector<256x128xf32>, vector<2x128xf32> -> vector<2x128xf32>
    %c0_15 = arith.constant 0 : index
    %c0_16 = arith.constant 0 : index
    %17 = vector.load %arg7[%c0_15, %c0_16] : memref<1x128xf32, #tpu.memory_space<vmem>>, vector<1x128xf32>
    %18 = vector.broadcast %17 : vector<1x128xf32> to vector<2x128xf32>
    %19 = arith.addf %16, %18 : vector<2x128xf32>
    %cst_17 = arith.constant 0.000000e+00 : f32
    %20 = vector.broadcast %cst_17 : f32 to vector<2x128xf32>
    %21 = arith.maximumf %19, %20 : vector<2x128xf32>
    %c0_18 = arith.constant 0 : index
    %c0_19 = arith.constant 0 : index
    %22 = vector.load %arg8[%c0_18, %c0_19] : memref<2x128xf32, #tpu.memory_space<vmem>>, vector<2x128xf32>
    tpu.vector_store %arg8[%c0_18, %c0_19], %21 {strides = array<i32>} : memref<2x128xf32, #tpu.memory_space<vmem>>, vector<2x128xf32>,
    return
  }
  func.func @transform_0(%arg0: i32) -> (i32, i32) {
    %c0_i32 = arith.constant 0 : i32
    %c0_i32_0 = arith.constant 0 : i32
    return %arg0, %c0_i32 : i32, i32
  }
  func.func @transform_1(%arg0: i32) -> (i32, i32) {
    %c0_i32 = arith.constant 0 : i32
    %c0_i32_0 = arith.constant 0 : i32
    %c0_i32_1 = arith.constant 0 : i32
    return %c0_i32, %c0_i32_0 : i32, i32
  }
  func.func @transform_2(%arg0: i32) -> (i32, i32) {
    %c0_i32 = arith.constant 0 : i32
    %c0_i32_0 = arith.constant 0 : i32
    %c0_i32_1 = arith.constant 0 : i32
    return %c0_i32, %c0_i32_0 : i32, i32
  }
  func.func @transform_3(%arg0: i32) -> (i32, i32) {
    %c0_i32 = arith.constant 0 : i32
    %c0_i32_0 = arith.constant 0 : i32
    %c0_i32_1 = arith.constant 0 : i32
    return %c0_i32, %c0_i32_0 : i32, i32
  }
  func.func @transform_4(%arg0: i32) -> (i32, i32) {
    %c0_i32 = arith.constant 0 : i32
    %c0_i32_0 = arith.constant 0 : i32
    %c0_i32_1 = arith.constant 0 : i32
    return %c0_i32, %c0_i32_0 : i32, i32
  }
  func.func @transform_5(%arg0: i32) -> (i32, i32) {
    %c0_i32 = arith.constant 0 : i32
    %c0_i32_0 = arith.constant 0 : i32
    %c0_i32_1 = arith.constant 0 : i32
    return %c0_i32, %c0_i32_0 : i32, i32
  }
  func.func @transform_6(%arg0: i32) -> (i32, i32) {
    %c0_i32 = arith.constant 0 : i32
    %c0_i32_0 = arith.constant 0 : i32
    %c0_i32_1 = arith.constant 0 : i32
    return %c0_i32, %c0_i32_0 : i32, i32
  }
  func.func @transform_7(%arg0: i32) -> (i32, i32) {
    %c0_i32 = arith.constant 0 : i32
    %c0_i32_0 = arith.constant 0 : i32
    return %arg0, %c0_i32 : i32, i32
  }
}

</mosaic_0001>

<llo_original>
// kernel: tpu_custom_call.1
$region0: #{tpu_custom_call.1}
  #allocation0 [shape = 'u32[]', space=smem, size = 0x4, offset = 0x4, fixed_abs, tag = 'smem constant byte address 0x4 - core index']
  #allocation1 [shape = 'u32[72,128]{1,0:T(1,128)}', space=vmem, size = 0x9000, scoped, tag = 'internal scratch']
  %s0 = inlined_call_operand.hbm [shape: f32[2,256], index: 0, kind: input, shape index: {}]
  %s1 = inlined_call_operand.hbm [shape: f32[256,256], index: 1, kind: input, shape index: {}]
  %s2 = inlined_call_operand.hbm [shape: f32[1,256], index: 2, kind: input, shape index: {}]
  %s3 = inlined_call_operand.hbm [shape: f32[256,256], index: 3, kind: input, shape index: {}]
  %s4 = inlined_call_operand.vmem [shape: f32[1,256], index: 4, kind: input, shape index: {}]
  %s5 = inlined_call_operand.hbm [shape: f32[256,128], index: 5, kind: input, shape index: {}]
  %s6 = inlined_call_operand.vmem [shape: f32[1,128], index: 6, kind: input, shape index: {}]
  %s7 = inlined_call_operand.hbm [shape: f32[2,128], index: 7, kind: output, shape index: {}]
  %s8 = sld [smem:[#allocation0]]
  $region58: #{tpu_custom_call.1} parent=0
    _
  %s10 = ssub.s32 1, %s8
  %s11 = scalar_select 0, %s10, %s8
  $region1: #{tpu_custom_call.1} parent=0
    #allocation2 [shape = 'u8[2048]{0}', space=vmem, size = 0x800, scoped, tag = 'input window, operand 0, single buffered']
    #allocation3 [shape = 's32[1]{0}', space=sflag, size = 0x4, scoped, tag = 'scoped memory for tpu_custom_call.1']
    #allocation4 [shape = 's32[1]{0}', space=sflag, size = 0x4, scoped, tag = 'scoped memory for tpu_custom_call.1']
    #allocation5 [shape = 'u8[262144]{0}', space=vmem, size = 0x40000, scoped, tag = 'input window, operand 1, single buffered']
    #allocation6 [shape = 's32[1]{0}', space=sflag, size = 0x4, scoped, tag = 'scoped memory for tpu_custom_call.1']
    #allocation7 [shape = 'u8[1024]{0}', space=vmem, size = 0x400, scoped, tag = 'input window, operand 2, single buffered']
    #allocation8 [shape = 'u8[262144]{0}', space=vmem, size = 0x40000, scoped, tag = 'input window, operand 3, single buffered']
    #allocation9 [shape = 's32[1]{0}', space=sflag, size = 0x4, scoped, tag = 'scoped memory for tpu_custom_call.1']
    #allocation10 [shape = 'u8[131072]{0}', space=vmem, size = 0x20000, scoped, tag = 'input window, operand 5, single buffered']
    #allocation11 [shape = 'u8[1024]{0}', space=vmem, size = 0x400, scoped, tag = 'output window, operand 0, single buffered']
    %12 = vsyncpa [#allocation3], 0
    %13 = vsyncpa [#allocation6], 0
    %14 = vsyncpa [#allocation9], 0
    %15 = vsyncpa [#allocation4], 0
    // Predicated region
    $region2: #{tpu_custom_call.1} parent=1 // pred_check
      _
    $region3: #{tpu_custom_call.1} parent=1 // pred_check_branch
      %17 = sbr.rel (0) target = $region5
    $region4: #{tpu_custom_call.1} parent=1 // pred_region
      %19 = vsyncadd [#allocation3], 0
      %s21 = sshll.u32 %s0, 4
      %s22 = int_to_ptr.hbm [resolvable:$true] %s21
      %s23 = sshll.u32 [#allocation2], 4
      %s24 = int_to_ptr.vmem [resolvable:$true] %s23
      %26 = dma.hbm_to_vmem [thread:$0]  %s22, 64, %s24, [#allocation3]
    $region5: #{tpu_custom_call.1} parent=1 // pred_fallthru
      _
    // Predicated region
    $region6: #{tpu_custom_call.1} parent=1 // pred_check
      _
    $region7: #{tpu_custom_call.1} parent=1 // pred_check_branch
      %28 = sbr.rel (0) target = $region9
    $region8: #{tpu_custom_call.1} parent=1 // pred_region
      %30 = vsyncadd [#allocation6], 0
      %s31 = sshll.u32 %s1, 4
      %s32 = int_to_ptr.hbm [resolvable:$true] %s31
      %s33 = sshll.u32 [#allocation5], 4
      %s34 = int_to_ptr.vmem [resolvable:$true] %s33
      %39 = dma.hbm_to_vmem [thread:$0]  %s32, 8192, %s34, [#allocation6], 256, 256, 16
    $region9: #{tpu_custom_call.1} parent=1 // pred_fallthru
      _
    // Predicated region
    $region10: #{tpu_custom_call.1} parent=1 // pred_check
      _
    $region11: #{tpu_custom_call.1} parent=1 // pred_check_branch
      %41 = sbr.rel (0) target = $region13
    $region12: #{tpu_custom_call.1} parent=1 // pred_region
      %43 = vsyncadd [#allocation6], 0
      %s45 = sshll.u32 %s2, 4
      %s46 = int_to_ptr.hbm [resolvable:$true] %s45
      %s47 = sshll.u32 [#allocation7], 4
      %s48 = int_to_ptr.vmem [resolvable:$true] %s47
      %50 = dma.hbm_to_vmem [thread:$0]  %s46, 32, %s48, [#allocation6]
    $region13: #{tpu_custom_call.1} parent=1 // pred_fallthru
      _
    // Predicated region
    $region14: #{tpu_custom_call.1} parent=1 // pred_check
      _
    $region15: #{tpu_custom_call.1} parent=1 // pred_check_branch
      %52 = sbr.rel (0) target = $region17
    $region16: #{tpu_custom_call.1} parent=1 // pred_region
      %54 = vsyncadd [#allocation9], 0
      %s55 = sshll.u32 %s3, 4
      %s56 = int_to_ptr.hbm [resolvable:$true] %s55
      %s57 = sshll.u32 [#allocation8], 4
      %s58 = int_to_ptr.vmem [resolvable:$true] %s57
      %63 = dma.hbm_to_vmem [thread:$0]  %s56, 8192, %s58, [#allocation9], 256, 256, 16
    $region17: #{tpu_custom_call.1} parent=1 // pred_fallthru
      _
    // Predicated region
    $region18: #{tpu_custom_call.1} parent=1 // pred_check
      _
    $region19: #{tpu_custom_call.1} parent=1 // pred_check_branch
      %65 = sbr.rel (0) target = $region21
    $region20: #{tpu_custom_call.1} parent=1 // pred_region
      _
    $region21: #{tpu_custom_call.1} parent=1 // pred_fallthru
      _
    // Predicated region
    $region22: #{tpu_custom_call.1} parent=1 // pred_check
      _
    $region23: #{tpu_custom_call.1} parent=1 // pred_check_branch
      %67 = sbr.rel (0) target = $region25
    $region24: #{tpu_custom_call.1} parent=1 // pred_region
      %69 = vsyncadd [#allocation9], 0
      %s70 = sshll.u32 %s5, 4
      %s71 = int_to_ptr.hbm [resolvable:$true] %s70
      %s72 = sshll.u32 [#allocation10], 4
      %s73 = int_to_ptr.vmem [resolvable:$true] %s72
      %78 = dma.hbm_to_vmem [thread:$0]  %s71, 4096, %s73, [#allocation9], 128, 128, 8
    $region25: #{tpu_custom_call.1} parent=1 // pred_fallthru
      _
    // Predicated region
    $region26: #{tpu_custom_call.1} parent=1 // pred_check
      _
    $region27: #{tpu_custom_call.1} parent=1 // pred_check_branch
      %80 = sbr.rel (0) target = $region29
    $region28: #{tpu_custom_call.1} parent=1 // pred_region
      _
    $region29: #{tpu_custom_call.1} parent=1 // pred_fallthru
      _
    // Predicated region
    $region30: #{tpu_custom_call.1} parent=1 // pred_check
      _
    $region31: #{tpu_custom_call.1} parent=1 // pred_check_branch
      %82 = sbr.rel (0) target = $region33
    $region32: #{tpu_custom_call.1} parent=1 // pred_region
      %84 = dma.done [#allocation3], 64
    $region33: #{tpu_custom_call.1} parent=1 // pred_fallthru
      _
    // Predicated region
    $region34: #{tpu_custom_call.1} parent=1 // pred_check
      _
    $region35: #{tpu_custom_call.1} parent=1 // pred_check_branch
      %86 = sbr.rel (0) target = $region37
    $region36: #{tpu_custom_call.1} parent=1 // pred_region
      %88 = dma.done [#allocation6], 8192
    $region37: #{tpu_custom_call.1} parent=1 // pred_fallthru
      _
    // Predicated region
    $region38: #{tpu_custom_call.1} parent=1 // pred_check
      _
    $region39: #{tpu_custom_call.1} parent=1 // pred_check_branch
      %90 = sbr.rel (0) target = $region41
    $region40: #{tpu_custom_call.1} parent=1 // pred_region
      %92 = dma.done [#allocation6], 32
    $region41: #{tpu_custom_call.1} parent=1 // pred_fallthru
      _
    // Predicated region
    $region42: #{tpu_custom_call.1} parent=1 // pred_check
      _
    $region43: #{tpu_custom_call.1} parent=1 // pred_check_branch
      %94 = sbr.rel (0) target = $region45
    $region44: #{tpu_custom_call.1} parent=1 // pred_region
      %96 = dma.done [#allocation9], 8192
    $region45: #{tpu_custom_call.1} parent=1 // pred_fallthru
      _
    // Predicated region
    $region46: #{tpu_custom_call.1} parent=1 // pred_check
      _
    $region47: #{tpu_custom_call.1} parent=1 // pred_check_branch
      %98 = sbr.rel (0) target = $region49
    $region48: #{tpu_custom_call.1} parent=1 // pred_region
      %100 = dma.done [#allocation9], 4096
    $region49: #{tpu_custom_call.1} parent=1 // pred_fallthru
      _
    %v101 = vld [vmem:[#allocation2] sm:$0xf]
    %v102 = vld [vmem:[#allocation5] sm:$0xff]
    %v103 = vld [vmem:[#allocation5 + $0x8] sm:$0xff]
    %v104 = vld [vmem:[#allocation5 + $0x10] sm:$0xff]
    %v105 = vld [vmem:[#allocation5 + $0x18] sm:$0xff]
    %v106 = vld [vmem:[#allocation5 + $0x20] sm:$0xff]
    %v107 = vld [vmem:[#allocation5 + $0x28] sm:$0xff]
    %v108 = vld [vmem:[#allocation5 + $0x30] sm:$0xff]
    %v109 = vld [vmem:[#allocation5 + $0x38] sm:$0xff]
    %v110 = vld [vmem:[#allocation5 + $0x40] sm:$0xff]
    %v111 = vld [vmem:[#allocation5 + $0x48] sm:$0xff]
    %v112 = vld [vmem:[#allocation5 + $0x50] sm:$0xff]
    %v113 = vld [vmem:[#allocation5 + $0x58] sm:$0xff]
    %v114 = vld [vmem:[#allocation5 + $0x60] sm:$0xff]
    %v115 = vld [vmem:[#allocation5 + $0x68] sm:$0xff]
    %v116 = vld [vmem:[#allocation5 + $0x70] sm:$0xff]
    %v117 = vld [vmem:[#allocation5 + $0x78] sm:$0xff]
    %v118 = vld [vmem:[#allocation5 + $0x80] sm:$0xff]
    %v119 = vld [vmem:[#allocation5 + $0x88] sm:$0xff]
    %v120 = vld [vmem:[#allocation5 + $0x90] sm:$0xff]
    %v121 = vld [vmem:[#allocation5 + $0x98] sm:$0xff]
    %v122 = vld [vmem:[#allocation5 + $0xa0] sm:$0xff]
    %v123 = vld [vmem:[#allocation5 + $0xa8] sm:$0xff]
    %v124 = vld [vmem:[#allocation5 + $0xb0] sm:$0xff]
    %v125 = vld [vmem:[#allocation5 + $0xb8] sm:$0xff]
    %v126 = vld [vmem:[#allocation5 + $0xc0] sm:$0xff]
    %v127 = vld [vmem:[#allocation5 + $0xc8] sm:$0xff]
    %v128 = vld [vmem:[#allocation5 + $0xd0] sm:$0xff]
    %v129 = vld [vmem:[#allocation5 + $0xd8] sm:$0xff]
    %v130 = vld [vmem:[#allocation5 + $0xe0] sm:$0xff]
    %v131 = vld [vmem:[#allocation5 + $0xe8] sm:$0xff]
    %v132 = vld [vmem:[#allocation5 + $0xf0] sm:$0xff]
    %v133 = vld [vmem:[#allocation5 + $0xf8] sm:$0xff]
    %v134 = vld [vmem:[#allocation5 + $0x100] sm:$0xff]
    %v135 = vld [vmem:[#allocation5 + $0x108] sm:$0xff]
    %v136 = vld [vmem:[#allocation5 + $0x110] sm:$0xff]
    %v137 = vld [vmem:[#allocation5 + $0x118] sm:$0xff]
    %v138 = vld [vmem:[#allocation5 + $0x120] sm:$0xff]
    %v139 = vld [vmem:[#allocation5 + $0x128] sm:$0xff]
    %v140 = vld [vmem:[#allocation5 + $0x130] sm:$0xff]
    %v141 = vld [vmem:[#allocation5 + $0x138] sm:$0xff]
    %v142 = vld [vmem:[#allocation5 + $0x140] sm:$0xff]
    %v143 = vld [vmem:[#allocation5 + $0x148] sm:$0xff]
    %v144 = vld [vmem:[#allocation5 + $0x150] sm:$0xff]
    %v145 = vld [vmem:[#allocation5 + $0x158] sm:$0xff]
    %v146 = vld [vmem:[#allocation5 + $0x160] sm:$0xff]
    %v147 = vld [vmem:[#allocation5 + $0x168] sm:$0xff]
    %v148 = vld [vmem:[#allocation5 + $0x170] sm:$0xff]
    %v149 = vld [vmem:[#allocation5 + $0x178] sm:$0xff]
    %v150 = vld [vmem:[#allocation5 + $0x180] sm:$0xff]
    %v151 = vld [vmem:[#allocation5 + $0x188] sm:$0xff]
    %v152 = vld [vmem:[#allocation5 + $0x190] sm:$0xff]
    %v153 = vld [vmem:[#allocation5 + $0x198] sm:$0xff]
    %v154 = vld [vmem:[#allocation5 + $0x1a0] sm:$0xff]
    %v155 = vld [vmem:[#allocation5 + $0x1a8] sm:$0xff]
    %v156 = vld [vmem:[#allocation5 + $0x1b0] sm:$0xff]
    %v157 = vld [vmem:[#allocation5 + $0x1b8] sm:$0xff]
    %v158 = vld [vmem:[#allocation5 + $0x1c0] sm:$0xff]
    %v159 = vld [vmem:[#allocation5 + $0x1c8] sm:$0xff]
    %v160 = vld [vmem:[#allocation5 + $0x1d0] sm:$0xff]
    %v161 = vld [vmem:[#allocation5 + $0x1d8] sm:$0xff]
    %v162 = vld [vmem:[#allocation5 + $0x1e0] sm:$0xff]
    %v163 = vld [vmem:[#allocation5 + $0x1e8] sm:$0xff]
    %v164 = vld [vmem:[#allocation5 + $0x1f0] sm:$0xff]
    %v165 = vld [vmem:[#allocation5 + $0x1f8] sm:$0xff]
    %v166 = vld [vmem:[#allocation7] sm:$0x3]
    %v168 = vperm.slane %v166, 0
    %v169 = vperm.slane %v166, 1
    %173 = vst [vmem:[#allocation1] ss:$4 sm:$0xff] %v101
    %v174 = vld.sshfl [vmem:[#allocation1] sm:$0xff pattern:$0x73625140]
    %v175 = vld.sshfl [vmem:[#allocation1 + $0x8] sm:$0xff pattern:$0x73625140]
    %178 = vmatpush.msra.mxu0 %v132
    %179 = vmatpush.msra.mxu0 %v130
    %180 = vmatpush.msra.mxu0 %v128
    %181 = vmatpush.msra.mxu0 %v126
    %182 = vmatpush.msra.mxu0 %v124
    %183 = vmatpush.msra.mxu0 %v122
    %184 = vmatpush.msra.mxu0 %v120
    %185 = vmatpush.msra.mxu0 %v118
    %186 = vmatpush.msra.mxu0 %v116
    %187 = vmatpush.msra.mxu0 %v114
    %188 = vmatpush.msra.mxu0 %v112
    %189 = vmatpush.msra.mxu0 %v110
    %190 = vmatpush.msra.mxu0 %v108
    %191 = vmatpush.msra.mxu0 %v106
    %192 = vmatpush.msra.mxu0 %v104
    %193 = vmatpush.msra.mxu0 %v102
    %194 = vmatmul.f32.gmra.mxu0 %v174
    %v195 = vpop.f32.mrf.mxu0
    %v196 = vadd.f32 %v168, %v195
    %197 = vdwg.mxu0
    %198 = vmatpush.msra.mxu0 %v164
    %199 = vmatpush.msra.mxu0 %v162
    %200 = vmatpush.msra.mxu0 %v160
    %201 = vmatpush.msra.mxu0 %v158
    %202 = vmatpush.msra.mxu0 %v156
    %203 = vmatpush.msra.mxu0 %v154
    %204 = vmatpush.msra.mxu0 %v152
    %205 = vmatpush.msra.mxu0 %v150
    %206 = vmatpush.msra.mxu0 %v148
    %207 = vmatpush.msra.mxu0 %v146
    %208 = vmatpush.msra.mxu0 %v144
    %209 = vmatpush.msra.mxu0 %v142
    %210 = vmatpush.msra.mxu0 %v140
    %211 = vmatpush.msra.mxu0 %v138
    %212 = vmatpush.msra.mxu0 %v136
    %213 = vmatpush.msra.mxu0 %v134
    %214 = vmatmul.f32.gmra.mxu0 %v175
    %v215 = vpop.f32.mrf.mxu0
    %v216 = vadd.f32 %v196, %v215
    %217 = vdwg.mxu0
    %218 = vmatpush.msra.mxu0 %v133
    %219 = vmatpush.msra.mxu0 %v131
    %220 = vmatpush.msra.mxu0 %v129
    %221 = vmatpush.msra.mxu0 %v127
    %222 = vmatpush.msra.mxu0 %v125
    %223 = vmatpush.msra.mxu0 %v123
    %224 = vmatpush.msra.mxu0 %v121
    %225 = vmatpush.msra.mxu0 %v119
    %226 = vmatpush.msra.mxu0 %v117
    %227 = vmatpush.msra.mxu0 %v115
    %228 = vmatpush.msra.mxu0 %v113
    %229 = vmatpush.msra.mxu0 %v111
    %230 = vmatpush.msra.mxu0 %v109
    %231 = vmatpush.msra.mxu0 %v107
    %232 = vmatpush.msra.mxu0 %v105
    %233 = vmatpush.msra.mxu0 %v103
    %234 = vmatmul.f32.gmra.mxu0 %v174
    %v235 = vpop.f32.mrf.mxu0
    %v236 = vadd.f32 %v169, %v235
    %237 = vdwg.mxu0
    %238 = vmatpush.msra.mxu0 %v165
    %239 = vmatpush.msra.mxu0 %v163
    %240 = vmatpush.msra.mxu0 %v161
    %241 = vmatpush.msra.mxu0 %v159
    %242 = vmatpush.msra.mxu0 %v157
    %243 = vmatpush.msra.mxu0 %v155
    %244 = vmatpush.msra.mxu0 %v153
    %245 = vmatpush.msra.mxu0 %v151
    %246 = vmatpush.msra.mxu0 %v149
    %247 = vmatpush.msra.mxu0 %v147
    %248 = vmatpush.msra.mxu0 %v145
    %249 = vmatpush.msra.mxu0 %v143
    %250 = vmatpush.msra.mxu0 %v141
    %251 = vmatpush.msra.mxu0 %v139
    %252 = vmatpush.msra.mxu0 %v137
    %253 = vmatpush.msra.mxu0 %v135
    %254 = vmatmul.f32.gmra.mxu0 %v175
    %v255 = vpop.f32.mrf.mxu0
    %v256 = vadd.f32 %v236, %v255
    %257 = vdwg.mxu0
    %v258 = vmax.f32 %v216, 0.0
    %v259 = vmax.f32 %v256, 0.0
    %v260 = vld [vmem:[#allocation8] sm:$0xff]
    %v261 = vld [vmem:[#allocation8 + $0x8] sm:$0xff]
    %v262 = vld [vmem:[#allocation8 + $0x10] sm:$0xff]
    %v263 = vld [vmem:[#allocation8 + $0x18] sm:$0xff]
    %v264 = vld [vmem:[#allocation8 + $0x20] sm:$0xff]
    %v265 = vld [vmem:[#allocation8 + $0x28] sm:$0xff]
    %v266 = vld [vmem:[#allocation8 + $0x30] sm:$0xff]
    %v267 = vld [vmem:[#allocation8 + $0x38] sm:$0xff]
    %v268 = vld [vmem:[#allocation8 + $0x40] sm:$0xff]
    %v269 = vld [vmem:[#allocation8 + $0x48] sm:$0xff]
    %v270 = vld [vmem:[#allocation8 + $0x50] sm:$0xff]
    %v271 = vld [vmem:[#allocation8 + $0x58] sm:$0xff]
    %v272 = vld [vmem:[#allocation8 + $0x60] sm:$0xff]
    %v273 = vld [vmem:[#allocation8 + $0x68] sm:$0xff]
    %v274 = vld [vmem:[#allocation8 + $0x70] sm:$0xff]
    %v275 = vld [vmem:[#allocation8 + $0x78] sm:$0xff]
    %v276 = vld [vmem:[#allocation8 + $0x80] sm:$0xff]
    %v277 = vld [vmem:[#allocation8 + $0x88] sm:$0xff]
    %v278 = vld [vmem:[#allocation8 + $0x90] sm:$0xff]
    %v279 = vld [vmem:[#allocation8 + $0x98] sm:$0xff]
    %v280 = vld [vmem:[#allocation8 + $0xa0] sm:$0xff]
    %v281 = vld [vmem:[#allocation8 + $0xa8] sm:$0xff]
    %v282 = vld [vmem:[#allocation8 + $0xb0] sm:$0xff]
    %v283 = vld [vmem:[#allocation8 + $0xb8] sm:$0xff]
    %v284 = vld [vmem:[#allocation8 + $0xc0] sm:$0xff]
    %v285 = vld [vmem:[#allocation8 + $0xc8] sm:$0xff]
    %v286 = vld [vmem:[#allocation8 + $0xd0] sm:$0xff]
    %v287 = vld [vmem:[#allocation8 + $0xd8] sm:$0xff]
    %v288 = vld [vmem:[#allocation8 + $0xe0] sm:$0xff]
    %v289 = vld [vmem:[#allocation8 + $0xe8] sm:$0xff]
    %v290 = vld [vmem:[#allocation8 + $0xf0] sm:$0xff]
    %v291 = vld [vmem:[#allocation8 + $0xf8] sm:$0xff]
    %v292 = vld [vmem:[#allocation8 + $0x100] sm:$0xff]
    %v293 = vld [vmem:[#allocation8 + $0x108] sm:$0xff]
    %v294 = vld [vmem:[#allocation8 + $0x110] sm:$0xff]
    %v295 = vld [vmem:[#allocation8 + $0x118] sm:$0xff]
    %v296 = vld [vmem:[#allocation8 + $0x120] sm:$0xff]
    %v297 = vld [vmem:[#allocation8 + $0x128] sm:$0xff]
    %v298 = vld [vmem:[#allocation8 + $0x130] sm:$0xff]
    %v299 = vld [vmem:[#allocation8 + $0x138] sm:$0xff]
    %v300 = vld [vmem:[#allocation8 + $0x140] sm:$0xff]
    %v301 = vld [vmem:[#allocation8 + $0x148] sm:$0xff]
    %v302 = vld [vmem:[#allocation8 + $0x150] sm:$0xff]
    %v303 = vld [vmem:[#allocation8 + $0x158] sm:$0xff]
    %v304 = vld [vmem:[#allocation8 + $0x160] sm:$0xff]
    %v305 = vld [vmem:[#allocation8 + $0x168] sm:$0xff]
    %v306 = vld [vmem:[#allocation8 + $0x170] sm:$0xff]
    %v307 = vld [vmem:[#allocation8 + $0x178] sm:$0xff]
    %v308 = vld [vmem:[#allocation8 + $0x180] sm:$0xff]
    %v309 = vld [vmem:[#allocation8 + $0x188] sm:$0xff]
    %v310 = vld [vmem:[#allocation8 + $0x190] sm:$0xff]
    %v311 = vld [vmem:[#allocation8 + $0x198] sm:$0xff]
    %v312 = vld [vmem:[#allocation8 + $0x1a0] sm:$0xff]
    %v313 = vld [vmem:[#allocation8 + $0x1a8] sm:$0xff]
    %v314 = vld [vmem:[#allocation8 + $0x1b0] sm:$0xff]
    %v315 = vld [vmem:[#allocation8 + $0x1b8] sm:$0xff]
    %v316 = vld [vmem:[#allocation8 + $0x1c0] sm:$0xff]
    %v317 = vld [vmem:[#allocation8 + $0x1c8] sm:$0xff]
    %v318 = vld [vmem:[#allocation8 + $0x1d0] sm:$0xff]
    %v319 = vld [vmem:[#allocation8 + $0x1d8] sm:$0xff]
    %v320 = vld [vmem:[#allocation8 + $0x1e0] sm:$0xff]
    %v321 = vld [vmem:[#allocation8 + $0x1e8] sm:$0xff]
    %v322 = vld [vmem:[#allocation8 + $0x1f0] sm:$0xff]
    %v323 = vld [vmem:[#allocation8 + $0x1f8] sm:$0xff]
    %v324 = vld [vmem:[%s4] sm:$0x3]
    %v326 = vperm.slane %v324, 0
    %v327 = vperm.slane %v324, 1
    %330 = vmatpush.msra.mxu0 %v290
    %331 = vmatpush.msra.mxu0 %v288
    %332 = vmatpush.msra.mxu0 %v286
    %333 = vmatpush.msra.mxu0 %v284
    %334 = vmatpush.msra.mxu0 %v282
    %335 = vmatpush.msra.mxu0 %v280
    %336 = vmatpush.msra.mxu0 %v278
    %337 = vmatpush.msra.mxu0 %v276
    %338 = vmatpush.msra.mxu0 %v274
    %339 = vmatpush.msra.mxu0 %v272
    %340 = vmatpush.msra.mxu0 %v270
    %341 = vmatpush.msra.mxu0 %v268
    %342 = vmatpush.msra.mxu0 %v266
    %343 = vmatpush.msra.mxu0 %v264
    %344 = vmatpush.msra.mxu0 %v262
    %345 = vmatpush.msra.mxu0 %v260
    %346 = vmatmul.f32.gmra.mxu0 %v258
    %v347 = vpop.f32.mrf.mxu0
    %v348 = vadd.f32 %v326, %v347
    %349 = vdwg.mxu0
    %350 = vmatpush.msra.mxu0 %v322
    %351 = vmatpush.msra.mxu0 %v320
    %352 = vmatpush.msra.mxu0 %v318
    %353 = vmatpush.msra.mxu0 %v316
    %354 = vmatpush.msra.mxu0 %v314
    %355 = vmatpush.msra.mxu0 %v312
    %356 = vmatpush.msra.mxu0 %v310
    %357 = vmatpush.msra.mxu0 %v308
    %358 = vmatpush.msra.mxu0 %v306
    %359 = vmatpush.msra.mxu0 %v304
    %360 = vmatpush.msra.mxu0 %v302
    %361 = vmatpush.msra.mxu0 %v300
    %362 = vmatpush.msra.mxu0 %v298
    %363 = vmatpush.msra.mxu0 %v296
    %364 = vmatpush.msra.mxu0 %v294
    %365 = vmatpush.msra.mxu0 %v292
    %366 = vmatmul.f32.gmra.mxu0 %v259
    %v367 = vpop.f32.mrf.mxu0
    %v368 = vadd.f32 %v348, %v367
    %369 = vdwg.mxu0
    %370 = vmatpush.msra.mxu0 %v291
    %371 = vmatpush.msra.mxu0 %v289
    %372 = vmatpush.msra.mxu0 %v287
    %373 = vmatpush.msra.mxu0 %v285
    %374 = vmatpush.msra.mxu0 %v283
    %375 = vmatpush.msra.mxu0 %v281
    %376 = vmatpush.msra.mxu0 %v279
    %377 = vmatpush.msra.mxu0 %v277
    %378 = vmatpush.msra.mxu0 %v275
    %379 = vmatpush.msra.mxu0 %v273
    %380 = vmatpush.msra.mxu0 %v271
    %381 = vmatpush.msra.mxu0 %v269
    %382 = vmatpush.msra.mxu0 %v267
    %383 = vmatpush.msra.mxu0 %v265
    %384 = vmatpush.msra.mxu0 %v263
    %385 = vmatpush.msra.mxu0 %v261
    %386 = vmatmul.f32.gmra.mxu0 %v258
    %v387 = vpop.f32.mrf.mxu0
    %v388 = vadd.f32 %v327, %v387
    %389 = vdwg.mxu0
    %390 = vmatpush.msra.mxu0 %v323
    %391 = vmatpush.msra.mxu0 %v321
    %392 = vmatpush.msra.mxu0 %v319
    %393 = vmatpush.msra.mxu0 %v317
    %394 = vmatpush.msra.mxu0 %v315
    %395 = vmatpush.msra.mxu0 %v313
    %396 = vmatpush.msra.mxu0 %v311
    %397 = vmatpush.msra.mxu0 %v309
    %398 = vmatpush.msra.mxu0 %v307
    %399 = vmatpush.msra.mxu0 %v305
    %400 = vmatpush.msra.mxu0 %v303
    %401 = vmatpush.msra.mxu0 %v301
    %402 = vmatpush.msra.mxu0 %v299
    %403 = vmatpush.msra.mxu0 %v297
    %404 = vmatpush.msra.mxu0 %v295
    %405 = vmatpush.msra.mxu0 %v293
    %406 = vmatmul.f32.gmra.mxu0 %v259
    %v407 = vpop.f32.mrf.mxu0
    %v408 = vadd.f32 %v388, %v407
    %409 = vdwg.mxu0
    %v410 = vmax.f32 %v368, 0.0
    %v411 = vmax.f32 %v408, 0.0
    %v412 = vld [vmem:[#allocation10] sm:$0xff]
    %v413 = vld [vmem:[#allocation10 + $0x8] sm:$0xff]
    %v414 = vld [vmem:[#allocation10 + $0x10] sm:$0xff]
    %v415 = vld [vmem:[#allocation10 + $0x18] sm:$0xff]
    %v416 = vld [vmem:[#allocation10 + $0x20] sm:$0xff]
    %v417 = vld [vmem:[#allocation10 + $0x28] sm:$0xff]
    %v418 = vld [vmem:[#allocation10 + $0x30] sm:$0xff]
    %v419 = vld [vmem:[#allocation10 + $0x38] sm:$0xff]
    %v420 = vld [vmem:[#allocation10 + $0x40] sm:$0xff]
    %v421 = vld [vmem:[#allocation10 + $0x48] sm:$0xff]
    %v422 = vld [vmem:[#allocation10 + $0x50] sm:$0xff]
    %v423 = vld [vmem:[#allocation10 + $0x58] sm:$0xff]
    %v424 = vld [vmem:[#allocation10 + $0x60] sm:$0xff]
    %v425 = vld [vmem:[#allocation10 + $0x68] sm:$0xff]
    %v426 = vld [vmem:[#allocation10 + $0x70] sm:$0xff]
    %v427 = vld [vmem:[#allocation10 + $0x78] sm:$0xff]
    %v428 = vld [vmem:[#allocation10 + $0x80] sm:$0xff]
    %v429 = vld [vmem:[#allocation10 + $0x88] sm:$0xff]
    %v430 = vld [vmem:[#allocation10 + $0x90] sm:$0xff]
    %v431 = vld [vmem:[#allocation10 + $0x98] sm:$0xff]
    %v432 = vld [vmem:[#allocation10 + $0xa0] sm:$0xff]
    %v433 = vld [vmem:[#allocation10 + $0xa8] sm:$0xff]
    %v434 = vld [vmem:[#allocation10 + $0xb0] sm:$0xff]
    %v435 = vld [vmem:[#allocation10 + $0xb8] sm:$0xff]
    %v436 = vld [vmem:[#allocation10 + $0xc0] sm:$0xff]
    %v437 = vld [vmem:[#allocation10 + $0xc8] sm:$0xff]
    %v438 = vld [vmem:[#allocation10 + $0xd0] sm:$0xff]
    %v439 = vld [vmem:[#allocation10 + $0xd8] sm:$0xff]
    %v440 = vld [vmem:[#allocation10 + $0xe0] sm:$0xff]
    %v441 = vld [vmem:[#allocation10 + $0xe8] sm:$0xff]
    %v442 = vld [vmem:[#allocation10 + $0xf0] sm:$0xff]
    %v443 = vld [vmem:[#allocation10 + $0xf8] sm:$0xff]
    %v444 = vld [vmem:[%s6] sm:$0x1]
    %v446 = vperm.slane %v444, 0
    %448 = vmatpush.msra.mxu0 %v427
    %449 = vmatpush.msra.mxu0 %v426
    %450 = vmatpush.msra.mxu0 %v425
    %451 = vmatpush.msra.mxu0 %v424
    %452 = vmatpush.msra.mxu0 %v423
    %453 = vmatpush.msra.mxu0 %v422
    %454 = vmatpush.msra.mxu0 %v421
    %455 = vmatpush.msra.mxu0 %v420
    %456 = vmatpush.msra.mxu0 %v419
    %457 = vmatpush.msra.mxu0 %v418
    %458 = vmatpush.msra.mxu0 %v417
    %459 = vmatpush.msra.mxu0 %v416
    %460 = vmatpush.msra.mxu0 %v415
    %461 = vmatpush.msra.mxu0 %v414
    %462 = vmatpush.msra.mxu0 %v413
    %463 = vmatpush.msra.mxu0 %v412
    %464 = vmatmul.f32.gmra.mxu0 %v410
    %v465 = vpop.f32.mrf.mxu0
    %v466 = vadd.f32 %v446, %v465
    %467 = vdwg.mxu0
    %468 = vmatpush.msra.mxu0 %v443
    %469 = vmatpush.msra.mxu0 %v442
    %470 = vmatpush.msra.mxu0 %v441
    %471 = vmatpush.msra.mxu0 %v440
    %472 = vmatpush.msra.mxu0 %v439
    %473 = vmatpush.msra.mxu0 %v438
    %474 = vmatpush.msra.mxu0 %v437
    %475 = vmatpush.msra.mxu0 %v436
    %476 = vmatpush.msra.mxu0 %v435
    %477 = vmatpush.msra.mxu0 %v434
    %478 = vmatpush.msra.mxu0 %v433
    %479 = vmatpush.msra.mxu0 %v432
    %480 = vmatpush.msra.mxu0 %v431
    %481 = vmatpush.msra.mxu0 %v430
    %482 = vmatpush.msra.mxu0 %v429
    %483 = vmatpush.msra.mxu0 %v428
    %484 = vmatmul.f32.gmra.mxu0 %v411
    %v485 = vpop.f32.mrf.mxu0
    %v486 = vadd.f32 %v466, %v485
    %487 = vdwg.mxu0
    %v488 = vmax.f32 %v486, 0.0
    %489 = vst [vmem:[#allocation11] sm:$0x3] %v488
    // Predicated region
    $region50: #{tpu_custom_call.1} parent=1 // pred_check
      _
    $region51: #{tpu_custom_call.1} parent=1 // pred_check_branch
      %491 = sbr.rel (0) target = $region53
    $region52: #{tpu_custom_call.1} parent=1 // pred_region
      %493 = vsyncadd [#allocation4], 0
      %s495 = sshll.u32 [#allocation11], 4
      %s496 = int_to_ptr.vmem [resolvable:$true] %s495
      %s497 = sshll.u32 %s7, 4
      %s498 = int_to_ptr.hbm [resolvable:$true] %s497
      %500 = dma.vmem_to_hbm [thread:$0]  %s496, 32, %s498, [#allocation4]
    $region53: #{tpu_custom_call.1} parent=1 // pred_fallthru
      _
    // Predicated region
    $region54: #{tpu_custom_call.1} parent=1 // pred_check
      _
    $region55: #{tpu_custom_call.1} parent=1 // pred_check_branch
      %502 = sbr.rel (0) target = $region57
    $region56: #{tpu_custom_call.1} parent=1 // pred_region
      %504 = dma.done [#allocation4], 32
    $region57: #{tpu_custom_call.1} parent=1 // pred_fallthru
      _
    %505 = vsyncpa [#allocation3], 1
    %506 = vsyncpa [#allocation6], 1
    %507 = vsyncpa [#allocation9], 1
    %508 = vsyncpa [#allocation4], 1

</llo_original>
